<compile_context>
chip_gen: v5e
topology: v5e:2x2
jax: 0.10.0
libtpu: 0.0.40
codegen_flags: <defaults>
</compile_context>

<pallas_src>
import math
import functools

import jax
import jax.numpy as jnp
from jax.experimental import pallas as pl
from jax.experimental.pallas import tpu as pltpu


def make_positional_encoding_table(max_len, d_model, dtype=jnp.float32):
    """Sinusoidal buffer, identical to the PyTorch __init__ (d_model must be even)."""
    position = jnp.arange(max_len, dtype=jnp.float32)[:, None]            # (L, 1)
    div_term = jnp.exp(
        jnp.arange(0, d_model, 2, dtype=jnp.float32) * (-math.log(10000.0) / d_model)
    )                                                                     # (D//2,)
    ang = position * div_term                                             # (L, D//2)
    pe = jnp.zeros((max_len, d_model), dtype=jnp.float32)
    pe = pe.at[:, 0::2].set(jnp.sin(ang))
    pe = pe.at[:, 1::2].set(jnp.cos(ang))
    # unsqueeze(0).transpose(0, 1) -> (max_len, 1, d_model)
    return pe[:, None, :].astype(dtype)


# ~6 MiB per x tile.  Eval: (in + out) double-buffered = 4x tile = 24 MiB.
# Training adds the mask input: 6x tile = 36 MiB.  Both fit the explicit
# 48 MiB vmem limit below (v7x physical VMEM is 64 MiB/TC).
_TILE_BUDGET_BYTES = 6 * 1024 * 1024
_VMEM_LIMIT_BYTES = 48 * 1024 * 1024


def _sublane_align(itemsize):
    # f32 -> 8 rows, bf16 -> 16, int8 -> 32 (native (8*32/itemsize, 128) tiling).
    return 8 * max(1, 4 // int(itemsize))


def _compute_dtype_for(x_dtype):
    """bf16-native compute on v6e/v7x; f32 everywhere else (and always for f32 x)."""
    if jnp.dtype(x_dtype) == jnp.dtype(jnp.bfloat16):
        kind = ""
        try:
            kind = jax.devices()[0].device_kind.lower()
        except Exception:
            pass
        if "v5" in kind:          # v5e/v5p have no bf16 VALU -> keep f32 compute
            return jnp.float32
        return jnp.bfloat16
    return jnp.float32


def _choose_ts_flat(S, row_elems, itemsize, align):
    """Seq-tile for the flattened (S, B*D) layout: multiple of `align` or == S."""
    row_bytes = row_elems * itemsize
    if S <= align:
        return S                                   # single full block (legal)
    t = max(1, _TILE_BUDGET_BYTES // row_bytes)
    t = min(t, S)
    t = max(align, (t // align) * align)
    if t >= S:
        # Prefer >= 2 grid steps so both v7x TensorCores stream.
        half = ((pl.cdiv(S, 2) + align - 1) // align) * align
        t = half if half < S else S
    return t


def _choose_tiles_3d(S, B, D, itemsize, align):
    """(tS, tB) for the (S, B, D) layout (used when B >= 8)."""
    row_bytes = B * D * itemsize
    if row_bytes <= _TILE_BUDGET_BYTES:
        tS = max(1, min(S, _TILE_BUDGET_BYTES // row_bytes))
        tB = B
    else:
        tS = 1
        tB = min(B, max(align, (_TILE_BUDGET_BYTES // (D * itemsize)) // align * align))
    # Guarantee >= 2 grid steps along a parallel axis when possible (v7x megacore).
    if pl.cdiv(S, tS) == 1 and pl.cdiv(B, tB) == 1 and S >= 2:
        tS = pl.cdiv(S, 2)        # tS is the 3rd-minor dim: no (8,128) constraint
    return tS, tB


# ---------------------------------------------------------------------------
# Kernels.  Flattened layout (B < 8): x/out blocks are (tS, B*D), pe block is
# (tS, D) replicated along lanes in-kernel.  3-D layout (B >= 8): x/out blocks
# are (tS, tB, D), pe block is (tS, 1, D) broadcast over the batch sublanes.
# ---------------------------------------------------------------------------

def _pe_lanes(pe_ref, B, compute_dtype):
    pe = pe_ref[...].astype(compute_dtype)                      # (tS, D)
    if B > 1:
        pe = jnp.concatenate([pe] * B, axis=-1)                 # (tS, B*D)
    return pe


def _eval_kernel_flat(x_ref, pe_ref, o_ref, *, B, compute_dtype):
    y = x_ref[...].astype(compute_dtype) + _pe_lanes(pe_ref, B, compute_dtype)
    o_ref[...] = y.astype(o_ref.dtype)


def _train_kernel_flat(x_ref, pe_ref, m_ref, o_ref, *, B, compute_dtype, scale):
    y = x_ref[...].astype(compute_dtype) + _pe_lanes(pe_ref, B, compute_dtype)
    # Inverted dropout: mask is {0,1} in x.dtype, scale is a weak Python float.
    y = y * m_ref[...].astype(compute_dtype) * scale
    o_ref[...] = y.astype(o_ref.dtype)


def _eval_kernel_3d(x_ref, pe_ref, o_ref, *, compute_dtype):
    y = x_ref[...].astype(compute_dtype) + pe_ref[...].astype(compute_dtype)
    o_ref[...] = y.astype(o_ref.dtype)


def _train_kernel_3d(x_ref, pe_ref, m_ref, o_ref, *, compute_dtype, scale):
    y = x_ref[...].astype(compute_dtype) + pe_ref[...].astype(compute_dtype)
    y = y * m_ref[...].astype(compute_dtype) * scale
    o_ref[...] = y.astype(o_ref.dtype)


# ---------------------------------------------------------------------------
# Wrapper
# ---------------------------------------------------------------------------

def positional_encoding(x, pe_table, *, p=0.1, training=False, seed=0):
    """Forward pass of PositionalEncoding: x + pe[:S], then dropout (id in eval)."""
    S, B, D = x.shape
    if S > pe_table.shape[0]:
        raise ValueError(f"seq_len {S} exceeds positional table max_len "
                         f"{pe_table.shape[0]}")
    if training and p >= 1.0:
        raise ValueError("dropout p must be < 1.0 in training mode")

    itemsize = jnp.dtype(x.dtype).itemsize
    pe_itemsize = jnp.dtype(pe_table.dtype).itemsize
    align = _sublane_align(itemsize)
    compute_dtype = _compute_dtype_for(x.dtype)
    use_dropout = training and p > 0.0
    scale = 1.0 / (1.0 - p) if use_dropout else 1.0

    if use_dropout:
        # Bernoulli keep mask in x.dtype (exact 0/1).  Same layout rules as x.
        # TODO(synk): cannot bit-match torch's RNG stream; keep-prob / (1-p)
        # scaling semantics are preserved.
        keep = jax.random.bernoulli(jax.random.PRNGKey(seed), 1.0 - p, (S, B, D))
        keep = keep.astype(x.dtype)

    flops = (3 if use_dropout else 1) * S * B * D
    bytes_acc = (2 + (1 if use_dropout else 0)) * S * B * D * itemsize \
        + S * D * pe_itemsize
    cost = pl.CostEstimate(flops=flops, transcendentals=0, bytes_accessed=bytes_acc)

    if B < 8:
        # ------- flattened (S, B*D) layout: sublane/lane-dense tiles -------
        BD = B * D
        x2 = x.reshape(S, BD)                          # free reshape (contiguous)
        pe2 = pe_table[:S, 0, :]                       # (S, D)
        tS = _choose_ts_flat(S, BD, itemsize, align)
        grid = (pl.cdiv(S, tS),)

        x_spec = pl.BlockSpec((tS, BD), lambda i: (i, 0))
        pe_spec = pl.BlockSpec((tS, D), lambda i: (i, 0))
        o_spec = pl.BlockSpec((tS, BD), lambda i: (i, 0))

        if use_dropout:
            kernel = functools.partial(_train_kernel_flat, B=B,
                                       compute_dtype=compute_dtype, scale=scale)
            in_specs = [x_spec, pe_spec, x_spec]
            args = (x2, pe2, keep.reshape(S, BD))
        else:
            kernel = functools.partial(_eval_kernel_flat, B=B,
                                       compute_dtype=compute_dtype)
            in_specs = [x_spec, pe_spec]
            args = (x2, pe2)

        out2 = pl.pallas_call(
            kernel,
            out_shape=jax.ShapeDtypeStruct((S, BD), x.dtype),
            grid=grid,
            in_specs=in_specs,
            out_specs=o_spec,
            compiler_params=pltpu.CompilerParams(
                dimension_semantics=("parallel",),
                vmem_limit_bytes=_VMEM_LIMIT_BYTES),
            cost_estimate=cost,
        )(*args)
        return out2.reshape(S, B, D)

    # ----------------- 3-D (S, B, D) layout: B already dense -----------------
    pe3 = pe_table[:S]                                 # (S, 1, D)
    tS, tB = _choose_tiles_3d(S, B, D, itemsize, align)
    grid = (pl.cdiv(S, tS), pl.cdiv(B, tB))

    x_spec = pl.BlockSpec((tS, tB, D), lambda i, j: (i, j, 0))
    # pe block is constant across the inner batch axis -> stays VMEM-resident.
    pe_spec = pl.BlockSpec((tS, 1, D), lambda i, j: (i, 0, 0))
    o_spec = pl.BlockSpec((tS, tB, D), lambda i, j: (i, j, 0))

    if use_dropout:
        kernel = functools.partial(_train_kernel_3d,
                                   compute_dtype=compute_dtype, scale=scale)
        in_specs = [x_spec, pe_spec, x_spec]
        args = (x, pe3, keep)
    else:
        kernel = functools.partial(_eval_kernel_3d, compute_dtype=compute_dtype)
        in_specs = [x_spec, pe_spec]
        args = (x, pe3)

    return pl.pallas_call(
        kernel,
        out_shape=jax.ShapeDtypeStruct((S, B, D), x.dtype),
        grid=grid,
        in_specs=in_specs,
        out_specs=o_spec,
        compiler_params=pltpu.CompilerParams(
            dimension_semantics=("parallel", "parallel"),
            vmem_limit_bytes=_VMEM_LIMIT_BYTES),
        cost_estimate=cost,
    )(*args)


if __name__ == "__main__":
    S, B, D = 16, 2, 32         # seq_len, batch, d_model (small demo shapes)
    MAX_LEN = 64                # only pe[:S] is used

    key = jax.random.PRNGKey(0)
    x = jax.random.normal(key, (S, B, D), dtype=jnp.float32)
    pe_table = make_positional_encoding_table(MAX_LEN, D, dtype=jnp.float32)

    # Eval-mode forward (dropout == identity), same as module.eval() in PyTorch.
    # With S=16 the flattened path picks tS=8 -> a real 2-step pipelined grid.
    out = jax.block_until_ready(
        positional_encoding(x, pe_table, p=0.1, training=False))

    ref = x + pe_table[:S]
    assert out.shape == (S, B, D) and out.dtype == x.dtype
    assert jnp.allclose(out, ref, atol=1e-6, rtol=1e-6)

    # Training-mode smoke test: every element is either 0 (dropped) or
    # ref / (1 - p) (kept, inverted-dropout scaling), with a sane keep rate.
    p_drop = 0.5
    out_tr = jax.block_until_ready(
        positional_encoding(x, pe_table, p=p_drop, training=True, seed=123))
    scaled = ref / (1.0 - p_drop)
    is_kept = jnp.isclose(out_tr, scaled, atol=1e-5, rtol=1e-5)
    is_dropped = jnp.abs(out_tr) < 1e-6
    assert bool(jnp.all(is_kept | is_dropped))
    keep_frac = float(jnp.mean(is_kept.astype(jnp.float32)))
    assert 0.25 < keep_frac < 0.75, keep_frac

    print("KERNEL_OK")
</pallas_src>

<mosaic_0001>
module attributes {stable_mosaic.version = 11 : i64} {
  func.func @_eval_kernel_flat(%arg0: i32, %arg1: memref<8x64xf32, #tpu.memory_space<vmem>>, %arg2: memref<8x32xf32, #tpu.memory_space<vmem>>, %arg3: memref<8x64xf32, #tpu.memory_space<vmem>>) attributes {dimension_semantics = [#tpu.dimension_semantics<parallel>], iteration_bounds = array<i64: 2>, scalar_prefetch = 0 : i64, scratch_operands = 0 : i64, tpu.core_type = #tpu.core_type<tc>, window_params = [{transform_indices = @transform_0, window_bounds = array<i64: 8, 64>}, {transform_indices = @transform_1, window_bounds = array<i64: 8, 32>}, {transform_indices = @transform_2, window_bounds = array<i64: 8, 64>}]} {
    %c0 = arith.constant 0 : index
    %c0_0 = arith.constant 0 : index
    %0 = vector.load %arg1[%c0, %c0_0] : memref<8x64xf32, #tpu.memory_space<vmem>>, vector<8x64xf32>
    %c0_1 = arith.constant 0 : index
    %c0_2 = arith.constant 0 : index
    %1 = vector.load %arg2[%c0_1, %c0_2] : memref<8x32xf32, #tpu.memory_space<vmem>>, vector<8x32xf32>
    %2 = tpu.concatenate %1, %1 in 1 : vector<8x32xf32>, vector<8x32xf32> -> vector<8x64xf32>
    %3 = arith.addf %0, %2 : vector<8x64xf32>
    %c0_3 = arith.constant 0 : index
    %c0_4 = arith.constant 0 : index
    %4 = vector.load %arg3[%c0_3, %c0_4] : memref<8x64xf32, #tpu.memory_space<vmem>>, vector<8x64xf32>
    tpu.vector_store %arg3[%c0_3, %c0_4], %3 {strides = array<i32>} : memref<8x64xf32, #tpu.memory_space<vmem>>, vector<8x64xf32>,
    return
  }
  func.func @transform_0(%arg0: i32) -> (i32, i32) {
    %c0_i32 = arith.constant 0 : i32
    %c0_i32_0 = arith.constant 0 : i32
    return %arg0, %c0_i32 : i32, i32
  }
  func.func @transform_1(%arg0: i32) -> (i32, i32) {
    %c0_i32 = arith.constant 0 : i32
    %c0_i32_0 = arith.constant 0 : i32
    return %arg0, %c0_i32 : i32, i32
  }
  func.func @transform_2(%arg0: i32) -> (i32, i32) {
    %c0_i32 = arith.constant 0 : i32
    %c0_i32_0 = arith.constant 0 : i32
    return %arg0, %c0_i32 : i32, i32
  }
}

</mosaic_0001>

<llo_original>
// kernel: tpu_custom_call.1
$region0: #{tpu_custom_call.1}
  #allocation0 [shape = 'u32[]', space=smem, size = 0x4, offset = 0x4, fixed_abs, tag = 'smem constant byte address 0x4 - core index']
  #allocation1 [shape = 'u32[72,128]{1,0:T(1,128)}', space=vmem, size = 0x9000, scoped, tag = 'internal scratch']
  %s0 = inlined_call_operand.hbm [shape: f32[16,64], index: 0, kind: input, shape index: {}]
  %s1 = inlined_call_operand.hbm [shape: f32[16,32], index: 1, kind: input, shape index: {}]
  %s2 = inlined_call_operand.hbm [shape: f32[16,64], index: 2, kind: output, shape index: {}]
  %s3 = sld [smem:[#allocation0]]
  $region49: #{tpu_custom_call.1} parent=0
    _
  %s5 = ssub.s32 1, %s3
  %s6 = scalar_select 0, %s5, %s3
  $region1: #{tpu_custom_call.1} parent=0
    #allocation2 [shape = 'u8[8192]{0}', space=vmem, size = 0x2000, scoped, tag = 'input window, operand 0']
    #allocation3 [shape = 's32[2]{0}', space=sflag, size = 0x8, scoped, tag = 'scoped memory for tpu_custom_call.1']
    #allocation4 [shape = 's32[2]{0}', space=sflag, size = 0x8, scoped, tag = 'scoped memory for tpu_custom_call.1']
    #allocation5 [shape = 'u8[8192]{0}', space=vmem, size = 0x2000, scoped, tag = 'input window, operand 1']
    #allocation6 [shape = 's32[2]{0}', space=sflag, size = 0x8, scoped, tag = 'scoped memory for tpu_custom_call.1']
    #allocation7 [shape = 'u8[8192]{0}', space=vmem, size = 0x2000, scoped, tag = 'output window, operand 0']
    %7 = vsyncpa [#allocation3], 0
    %s8 = scalar_lea.sflag [#allocation3], 1
    %9 = vsyncpa %s8, 0
    %10 = vsyncpa [#allocation6], 0
    %s11 = scalar_lea.sflag [#allocation6], 1
    %12 = vsyncpa %s11, 0
    %13 = vsyncpa [#allocation4], 0
    %s14 = scalar_lea.sflag [#allocation4], 1
    %15 = vsyncpa %s14, 0
    loop: start=0, step=1, limit=4
    $region2: #{tpu_custom_call.1} parent=1 // loop_pre_header
      _
    $region3: #{tpu_custom_call.1} parent=1 // loop_header
      %s17 = sphi 0, %s21
      %p18 = scmp.ge.s32.totalorder %s17, 4
      %s27 = sphi 0, %s29
      %s30 = sphi 0, %s27
      %s31 = sphi 0, %s30
      %s47 = sphi 0, %s31
      %s53 = sphi 0, %s55
      %s56 = sphi 0, %s53
      %s57 = sphi 0, %s56
      %s73 = sphi 0, %s57
      %s79 = sphi 0, %s81
      %s82 = sphi 0, %s79
      %s83 = sphi 0, %s82
      %s99 = sphi 0, %s83
    $region4: #{tpu_custom_call.1} parent=1 // loop_header_branch
      %20 = sbr.rel (%p18) target = $region8
    $region5: #{tpu_custom_call.1} parent=1 // loop_body
      %s22 = ssub.s32 %s17, 1
      %s23 = ssub.s32 %s17, 2
      %s24 = sadd.s32 %s17, 1
      %s25 = ssub.s32 %s17, %s24
      %p26 = scmp.eq.s32.totalorder %s25, 0
      %s28 = sadd.s32 %s27, 1
      %s29 = scalar_select %p26, %s27, %s28
      %p32 = pneg %p26
      %p33 = scmp.eq.s32.totalorder %s17, 1
      %p34 = por %p32, %p33
      %p35 = scmp.ne.s32.totalorder %s27, %s30
      %p36 = scmp.eq.s32.totalorder %s17, 0
      %p37 = por %p35, %p36
      %p38 = scmp.ne.s32.totalorder %s27, %s30
      %p39 = scmp.eq.s32.totalorder %s22, 1
      %p40 = por %p38, %p39
      %p41 = scmp.ne.s32.totalorder %s30, %s31
      %p42 = scmp.eq.s32.totalorder %s22, 0
      %p43 = por %p41, %p42
      %p44 = scmp.ne.s32.totalorder %s30, %s31
      %p45 = scmp.eq.s32.totalorder %s23, 1
      %p46 = por %p44, %p45
      %p48 = scmp.ne.s32.totalorder %s31, %s47
      %p49 = scmp.eq.s32.totalorder %s23, 0
      %p50 = por %p48, %p49
      %s51 = ssub.s32 %s17, %s24
      %p52 = scmp.eq.s32.totalorder %s51, 0
      %s54 = sadd.s32 %s53, 1
      %s55 = scalar_select %p52, %s53, %s54
      %p58 = pneg %p52
      %p59 = scmp.eq.s32.totalorder %s17, 1
      %p60 = por %p58, %p59
      %p61 = scmp.ne.s32.totalorder %s53, %s56
      %p62 = scmp.eq.s32.totalorder %s17, 0
      %p63 = por %p61, %p62
      %p64 = scmp.ne.s32.totalorder %s53, %s56
      %p65 = scmp.eq.s32.totalorder %s22, 1
      %p66 = por %p64, %p65
      %p67 = scmp.ne.s32.totalorder %s56, %s57
      %p68 = scmp.eq.s32.totalorder %s22, 0
      %p69 = por %p67, %p68
      %p70 = scmp.ne.s32.totalorder %s56, %s57
      %p71 = scmp.eq.s32.totalorder %s23, 1
      %p72 = por %p70, %p71
      %p74 = scmp.ne.s32.totalorder %s57, %s73
      %p75 = scmp.eq.s32.totalorder %s23, 0
      %p76 = por %p74, %p75
      %s77 = ssub.s32 %s17, %s24
      %p78 = scmp.eq.s32.totalorder %s77, 0
      %s80 = sadd.s32 %s79, 1
      %s81 = scalar_select %p78, %s79, %s80
      %p84 = pneg %p78
      %p85 = scmp.eq.s32.totalorder %s17, 1
      %p86 = por %p84, %p85
      %p87 = scmp.ne.s32.totalorder %s79, %s82
      %p88 = scmp.eq.s32.totalorder %s17, 0
      %p89 = por %p87, %p88
      %p90 = scmp.ne.s32.totalorder %s79, %s82
      %p91 = scmp.eq.s32.totalorder %s22, 1
      %p92 = por %p90, %p91
      %p93 = scmp.ne.s32.totalorder %s82, %s83
      %p94 = scmp.eq.s32.totalorder %s22, 0
      %p95 = por %p93, %p94
      %p96 = scmp.ne.s32.totalorder %s82, %s83
      %p97 = scmp.eq.s32.totalorder %s23, 1
      %p98 = por %p96, %p97
      %p100 = scmp.ne.s32.totalorder %s83, %s99
      %p101 = scmp.eq.s32.totalorder %s23, 0
      %p102 = por %p100, %p101
      %p103 = scmp.le.s32.totalorder 1, %s17
      %p104 = scmp.lt.s32.totalorder %s17, 3
      %p105 = pnand %p103, %p104
      %p106 = pneg %p105
      // Predicated region
      $region9: #{tpu_custom_call.1} parent=5 // pred_check
        _
      $region10: #{tpu_custom_call.1} parent=5 // pred_check_branch
        %108 = sbr.rel (%p105) target = $region12
      $region11: #{tpu_custom_call.1} parent=5 // pred_region
        %s109 = ssub.s32 %s17, 1
      $region12: #{tpu_custom_call.1} parent=5 // pred_fallthru
        _
      %p110 = scmp.lt.s32.totalorder %s17, 2
      // Predicated region
      $region13: #{tpu_custom_call.1} parent=5 // pred_check
        %p111 = pneg %p110
      $region14: #{tpu_custom_call.1} parent=5 // pred_check_branch
        %113 = sbr.rel (%p111) target = $region16
      $region15: #{tpu_custom_call.1} parent=5 // pred_region
        // Predicated region
        $region17: #{tpu_custom_call.1} parent=15 // pred_check
          %p114 = pneg %p37
        $region18: #{tpu_custom_call.1} parent=15 // pred_check_branch
          %116 = sbr.rel (%p114) target = $region20
        $region19: #{tpu_custom_call.1} parent=15 // pred_region
          %s117 = sand.u32 %s27, 1
          %s118 = scalar_lea.sflag [#allocation3], %s117
          %s119 = sand.u32 %s27, 1
          %s120 = smul.addr %s119, 8
          %s121 = scalar_lea.vmem [#allocation2], %s120
          %123 = vsyncadd %s118, 0
          %s124 = smul.addr %s17, 8
          %s125 = scalar_lea.hbm %s0, %s124
          %s127 = sshll.u32 %s125, 4
          %s128 = int_to_ptr.hbm [resolvable:$true] %s127
          %s129 = sshll.u32 %s121, 4
          %s130 = int_to_ptr.vmem [resolvable:$true] %s129
          %132 = dma.hbm_to_vmem [thread:$0]  %s128, 128, %s130, %s118
        $region20: #{tpu_custom_call.1} parent=15 // pred_fallthru
          _
        // Predicated region
        $region21: #{tpu_custom_call.1} parent=15 // pred_check
          %p133 = pneg %p63
        $region22: #{tpu_custom_call.1} parent=15 // pred_check_branch
          %135 = sbr.rel (%p133) target = $region24
        $region23: #{tpu_custom_call.1} parent=15 // pred_region
          %s136 = sand.u32 %s53, 1
          %s137 = scalar_lea.sflag [#allocation6], %s136
          %s138 = sand.u32 %s53, 1
          %s139 = smul.addr %s138, 8
          %s140 = scalar_lea.vmem [#allocation5], %s139
          %142 = vsyncadd %s137, 0
          %s143 = smul.addr %s17, 8
          %s144 = scalar_lea.hbm %s1, %s143
          %s146 = sshll.u32 %s144, 4
          %s147 = int_to_ptr.hbm [resolvable:$true] %s146
          %s148 = sshll.u32 %s140, 4
          %s149 = int_to_ptr.vmem [resolvable:$true] %s148
          %151 = dma.hbm_to_vmem [thread:$0]  %s147, 128, %s149, %s137
        $region24: #{tpu_custom_call.1} parent=15 // pred_fallthru
          _
      $region16: #{tpu_custom_call.1} parent=5 // pred_fallthru
        _
      %p152 = scmp.le.s32.totalorder 1, %s17
      %p153 = scmp.lt.s32.totalorder %s17, 3
      %p154 = pnand %p152, %p153
      %p155 = pneg %p154
      // Predicated region
      $region25: #{tpu_custom_call.1} parent=5 // pred_check
        _
      $region26: #{tpu_custom_call.1} parent=5 // pred_check_branch
        %157 = sbr.rel (%p154) target = $region28
      $region27: #{tpu_custom_call.1} parent=5 // pred_region
        %s158 = ssub.s32 %s17, 1
        %s159 = sand.u32 %s30, 1
        %s160 = scalar_lea.sflag [#allocation3], %s159
        %s161 = sand.u32 %s30, 1
        %s162 = smul.addr %s161, 8
        %s163 = scalar_lea.vmem [#allocation2], %s162
        // Predicated region
        $region29: #{tpu_custom_call.1} parent=27 // pred_check
          %p164 = pneg %p43
        $region30: #{tpu_custom_call.1} parent=27 // pred_check_branch
          %166 = sbr.rel (%p164) target = $region32
        $region31: #{tpu_custom_call.1} parent=27 // pred_region
          %168 = dma.done %s160, 128
        $region32: #{tpu_custom_call.1} parent=27 // pred_fallthru
          _
        %s169 = sand.u32 %s56, 1
        %s170 = scalar_lea.sflag [#allocation6], %s169
        %s171 = sand.u32 %s56, 1
        %s172 = smul.addr %s171, 8
        %s173 = scalar_lea.vmem [#allocation5], %s172
        // Predicated region
        $region33: #{tpu_custom_call.1} parent=27 // pred_check
          %p174 = pneg %p69
        $region34: #{tpu_custom_call.1} parent=27 // pred_check_branch
          %176 = sbr.rel (%p174) target = $region36
        $region35: #{tpu_custom_call.1} parent=27 // pred_region
          %178 = dma.done %s170, 128
        $region36: #{tpu_custom_call.1} parent=27 // pred_fallthru
          _
        %s179 = sand.u32 %s30, 1
        %s180 = scalar_lea.sflag [#allocation3], %s179
        %s181 = sand.u32 %s30, 1
        %s182 = smul.addr %s181, 8
        %s183 = scalar_lea.vmem [#allocation2], %s182
        %p184 = pneg %p43
        %p185 = pneg %p40
        %s186 = sand.u32 %s56, 1
        %s187 = scalar_lea.sflag [#allocation6], %s186
        %s188 = sand.u32 %s56, 1
        %s189 = smul.addr %s188, 8
        %s190 = scalar_lea.vmem [#allocation5], %s189
        %p191 = pneg %p69
        %p192 = pneg %p66
        %p193 = pneg %p95
        %p194 = pneg %p92
        %s195 = sand.u32 %s82, 1
        %s196 = scalar_lea.sflag [#allocation4], %s195
        %s197 = sand.u32 %s82, 1
        %s198 = smul.addr %s197, 8
        %s199 = scalar_lea.vmem [#allocation7], %s198
        %v200 = vld [vmem:[%s163] sm:$0xff]
        %v201 = vld [vmem:[%s173] sm:$0xff]
        %203 = vrot.lane.b32.xlu0 %v201, 32
        %v204 = vpop.permute.xlu0 %203
        %vm206 = vcmask 261120
        %v207 = vsel %vm206, %v201, %v204
        %v208 = vadd.f32 %v200, %v207
        %vm209 = vcmask 523264
        %210 = vst.msk [vmem:[%s199] sm:$0xff] %vm209, %v208
        %s211 = sand.u32 %s82, 1
        %s212 = scalar_lea.sflag [#allocation4], %s211
        %s213 = sand.u32 %s82, 1
        %s214 = smul.addr %s213, 8
        %s215 = scalar_lea.vmem [#allocation7], %s214
        // Predicated region
        $region37: #{tpu_custom_call.1} parent=27 // pred_check
          %p216 = pneg %p92
        $region38: #{tpu_custom_call.1} parent=27 // pred_check_branch
          %218 = sbr.rel (%p216) target = $region40
        $region39: #{tpu_custom_call.1} parent=27 // pred_region
          %220 = vsyncadd %s212, 0
          %s221 = smul.addr %s22, 8
          %s222 = scalar_lea.hbm %s2, %s221
          %s224 = sshll.u32 %s215, 4
          %s225 = int_to_ptr.vmem [resolvable:$true] %s224
          %s226 = sshll.u32 %s222, 4
          %s227 = int_to_ptr.hbm [resolvable:$true] %s226
          %229 = dma.vmem_to_hbm [thread:$0]  %s225, 128, %s227, %s212
        $region40: #{tpu_custom_call.1} parent=27 // pred_fallthru
          _
      $region28: #{tpu_custom_call.1} parent=5 // pred_fallthru
        _
      %p230 = scmp.le.s32.totalorder 2, %s17
      // Predicated region
      $region41: #{tpu_custom_call.1} parent=5 // pred_check
        %p231 = pneg %p230
      $region42: #{tpu_custom_call.1} parent=5 // pred_check_branch
        %233 = sbr.rel (%p231) target = $region44
      $region43: #{tpu_custom_call.1} parent=5 // pred_region
        %s234 = ssub.s32 %s17, 2
        // Predicated region
        $region45: #{tpu_custom_call.1} parent=43 // pred_check
          %p235 = pneg %p98
        $region46: #{tpu_custom_call.1} parent=43 // pred_check_branch
          %237 = sbr.rel (%p235) target = $region48
        $region47: #{tpu_custom_call.1} parent=43 // pred_region
          %s238 = sand.u32 %s83, 1
          %s239 = scalar_lea.sflag [#allocation4], %s238
          %s240 = sand.u32 %s83, 1
          %s241 = smul.addr %s240, 8
          %s242 = scalar_lea.vmem [#allocation7], %s241
          %244 = dma.done %s239, 128
        $region48: #{tpu_custom_call.1} parent=43 // pred_fallthru
          _
      $region44: #{tpu_custom_call.1} parent=5 // pred_fallthru
        _
    $region6: #{tpu_custom_call.1} parent=1 // loop_footer
      %s21 = sadd.s32 1, %s17
    $region7: #{tpu_custom_call.1} parent=1 // loop_footer_branch
      %16 = sbr.rel target = $region3
    $region8: #{tpu_custom_call.1} parent=1 // loop_exit
      _
    %245 = vsyncpa [#allocation3], 1
    %s246 = scalar_lea.sflag [#allocation3], 1
    %247 = vsyncpa %s246, 1
    %248 = vsyncpa [#allocation6], 1
    %s249 = scalar_lea.sflag [#allocation6], 1
    %250 = vsyncpa %s249, 1
    %251 = vsyncpa [#allocation4], 1
    %s252 = scalar_lea.sflag [#allocation4], 1
    %253 = vsyncpa %s252, 1

</llo_original>
